<compile_context>
chip_gen: v5e
topology: v5e:2x2
jax: 0.10.0
libtpu: 0.0.40
codegen_flags: <defaults>
</compile_context>

<pallas_src>
import jax
import jax.numpy as jnp
from jax.experimental import pallas as pl
from jax.experimental.pallas import tpu as pltpu


def _round_up(x, m):
    return (x + m - 1) // m * m


def qnetwork_kernel(x_ref, w1_ref, w2_ref, w3_ref, b_ref, out_ref):
    H = w1_ref.shape[1]
    # Packed biases [b1 | b2 | b3_padded]; all slices are static & lane-aligned.
    b1 = b_ref[:, :H]
    b2 = b_ref[:, H:2 * H]
    b3 = b_ref[:, 2 * H:]

    # Layer 1: Linear + ReLU (bf16 operands, f32 MXU accumulation).
    h1 = jnp.dot(x_ref[...], w1_ref[...], preferred_element_type=jnp.float32)
    h1 = jnp.maximum(h1 + b1, 0.0)

    # Layer 2: Linear + ReLU.
    h2 = jnp.dot(h1.astype(w2_ref.dtype), w2_ref[...],
                 preferred_element_type=jnp.float32)
    h2 = jnp.maximum(h2 + b2, 0.0)

    # Layer 3: Linear (lane-padded to 128 output columns -> unmasked stores).
    q = jnp.dot(h2.astype(w3_ref.dtype), w3_ref[...],
                preferred_element_type=jnp.float32)
    out_ref[...] = (q + b3).astype(out_ref.dtype)


def pack_params(params, *, compute_dtype=jnp.bfloat16):
    """Pre-pack params once: pad lane dims, cast matmul weights to bf16,
    and fuse the three biases into a single array."""
    w1, b1 = params["w1"], params["b1"]
    w2, b2 = params["w2"], params["b2"]
    w3, b3 = params["w3"], params["b3"]
    n_obs, hidden = w1.shape
    n_actions = w3.shape[1]
    obs_pad = _round_up(n_obs, 8)
    act_pad = _round_up(n_actions, 128)

    w1p = jnp.pad(w1, ((0, obs_pad - n_obs), (0, 0))).astype(compute_dtype)
    w2p = w2.astype(compute_dtype)
    w3p = jnp.pad(w3, ((0, 0), (0, act_pad - n_actions))).astype(compute_dtype)
    b3p = jnp.pad(b3, ((0, 0), (0, act_pad - n_actions)))
    b = jnp.concatenate([b1, b2, b3p], axis=1).astype(jnp.float32)

    return {"w1": w1p, "w2": w2p, "w3": w3p, "b": b,
            "n_obs": n_obs, "n_actions": n_actions}


def qnetwork_forward(x, packed, *, tile_b=None):
    """x: (B, n_obs) float32. packed: output of pack_params."""
    w1, w2, w3, b = packed["w1"], packed["w2"], packed["w3"], packed["b"]
    n_obs, n_actions = packed["n_obs"], packed["n_actions"]
    obs_pad, hidden = w1.shape
    act_pad = w3.shape[1]

    B = x.shape[0]
    if tile_b is None:
        # 128 rows per tile (fills v5e's 128-wide MXU); smaller batches get one
        # tile rounded up to the 8-row sublane granule.
        tile_b = 128 if B >= 128 else _round_up(B, 8)
    assert tile_b % 8 == 0
    B_pad = _round_up(B, tile_b)

    # Pad batch/obs dims and cast the activation operand to bf16.
    xp = jnp.zeros((B_pad, obs_pad), dtype=w1.dtype)
    xp = xp.at[:B, :n_obs].set(x.astype(w1.dtype))

    grid = (B_pad // tile_b,)
    resident = lambda a: pl.BlockSpec(a.shape, lambda i: (0,) * a.ndim)

    itemsize = lambda a: jnp.dtype(a.dtype).itemsize
    flops = 2 * B_pad * (obs_pad * hidden + hidden * hidden + hidden * act_pad)
    bytes_accessed = (xp.size * itemsize(xp)
                      + w1.size * itemsize(w1) + w2.size * itemsize(w2)
                      + w3.size * itemsize(w3) + b.size * itemsize(b)
                      + B_pad * act_pad * 4)

    out = pl.pallas_call(
        qnetwork_kernel,
        out_shape=jax.ShapeDtypeStruct((B_pad, act_pad), jnp.float32),
        grid=grid,
        in_specs=[
            pl.BlockSpec((tile_b, obs_pad), lambda i: (i, 0)),  # batch-tiled x
            resident(w1), resident(w2), resident(w3), resident(b),
        ],
        out_specs=pl.BlockSpec((tile_b, act_pad), lambda i: (i, 0)),
        compiler_params=pltpu.CompilerParams(
            dimension_semantics=("parallel",),
        ),
        cost_estimate=pl.CostEstimate(
            flops=flops, transcendentals=0, bytes_accessed=bytes_accessed),
    )(xp, w1, w2, w3, b)

    return out[:B, :n_actions]


def init_params(key, n_observations, n_actions, hidden_size=256):
    """nn.Linear default init: U(-1/sqrt(fan_in), 1/sqrt(fan_in)).
    Weights stored as (in_features, out_features) for x @ W."""
    def linear_init(k, fan_in, fan_out):
        kw, kb = jax.random.split(k)
        bound = 1.0 / jnp.sqrt(jnp.float32(fan_in))
        w = jax.random.uniform(kw, (fan_in, fan_out), jnp.float32, -bound, bound)
        b = jax.random.uniform(kb, (1, fan_out), jnp.float32, -bound, bound)
        return w, b

    k1, k2, k3 = jax.random.split(key, 3)
    w1, b1 = linear_init(k1, n_observations, hidden_size)
    w2, b2 = linear_init(k2, hidden_size, hidden_size)
    w3, b3 = linear_init(k3, hidden_size, n_actions)
    return {"w1": w1, "b1": b1, "w2": w2, "b2": b2, "w3": w3, "b3": b3}


def qnetwork_ref(x, p):
    h1 = jnp.maximum(x @ p["w1"] + p["b1"], 0.0)
    h2 = jnp.maximum(h1 @ p["w2"] + p["b2"], 0.0)
    return h2 @ p["w3"] + p["b3"]


def qnetwork_ref_bf16(x, p):
    bf, f32 = jnp.bfloat16, jnp.float32
    h1 = jnp.dot(x.astype(bf), p["w1"].astype(bf), preferred_element_type=f32)
    h1 = jnp.maximum(h1 + p["b1"], 0.0)
    h2 = jnp.dot(h1.astype(bf), p["w2"].astype(bf), preferred_element_type=f32)
    h2 = jnp.maximum(h2 + p["b2"], 0.0)
    return jnp.dot(h2.astype(bf), p["w3"].astype(bf), preferred_element_type=f32) + p["b3"]


if __name__ == "__main__":
    # CartPole-like shapes: 4 observations, 2 actions, hidden=256, small batch.
    batch = 8
    n_observations = 4
    n_actions = 2
    hidden_size = 256

    key = jax.random.PRNGKey(0)
    kx, kp, kx2 = jax.random.split(key, 3)
    x = jax.random.normal(kx, (batch, n_observations), dtype=jnp.float32)
    params = init_params(kp, n_observations, n_actions, hidden_size)
    packed = pack_params(params)

    out = jax.block_until_ready(qnetwork_forward(x, packed))
    assert out.shape == (batch, n_actions)
    # bf16 matmul operands: tight check vs a bf16-aware reference, loose vs f32.
    assert jnp.allclose(out, qnetwork_ref_bf16(x, params), atol=1e-2, rtol=1e-2), \
        "mismatch vs bf16 JAX reference"
    assert jnp.allclose(out, qnetwork_ref(x, params), atol=5e-2, rtol=5e-2), \
        "mismatch vs f32 JAX reference"

    # Exercise the multi-tile, parallel batch-grid path (4 tiles of 8 rows).
    x2 = jax.random.normal(kx2, (32, n_observations), dtype=jnp.float32)
    out2 = jax.block_until_ready(qnetwork_forward(x2, packed, tile_b=8))
    assert out2.shape == (32, n_actions)
    assert jnp.allclose(out2, qnetwork_ref_bf16(x2, params), atol=1e-2, rtol=1e-2), \
        "mismatch vs bf16 JAX reference (tiled grid)"

    print("KERNEL_OK")
</pallas_src>

<mosaic_0001>
module attributes {stable_mosaic.version = 11 : i64} {
  func.func @qnetwork_kernel(%arg0: i32, %arg1: memref<8x8xbf16, #tpu.memory_space<vmem>>, %arg2: memref<8x256xbf16, #tpu.memory_space<vmem>>, %arg3: memref<256x256xbf16, #tpu.memory_space<vmem>>, %arg4: memref<256x128xbf16, #tpu.memory_space<vmem>>, %arg5: memref<1x640xf32, #tpu.memory_space<vmem>>, %arg6: memref<8x128xf32, #tpu.memory_space<vmem>>) attributes {dimension_semantics = [#tpu.dimension_semantics<parallel>], iteration_bounds = array<i64: 1>, scalar_prefetch = 0 : i64, scratch_operands = 0 : i64, tpu.core_type = #tpu.core_type<tc>, window_params = [{transform_indices = @transform_0, window_bounds = array<i64: 8, 8>}, {pipeline_mode = #tpu.pipeline_mode<synchronous>, transform_indices = @transform_1, window_bounds = array<i64: 8, 256>}, {pipeline_mode = #tpu.pipeline_mode<synchronous>, transform_indices = @transform_2, window_bounds = array<i64: 256, 256>}, {pipeline_mode = #tpu.pipeline_mode<synchronous>, transform_indices = @transform_3, window_bounds = array<i64: 256, 128>}, {pipeline_mode = #tpu.pipeline_mode<synchronous>, transform_indices = @transform_4, window_bounds = array<i64: 1, 640>}, {transform_indices = @transform_5, window_bounds = array<i64: 8, 128>}]} {
    %c0 = arith.constant 0 : index
    %c0_0 = arith.constant 0 : index
    %0 = vector.load %arg5[%c0, %c0_0] : memref<1x640xf32, #tpu.memory_space<vmem>>, vector<1x256xf32>
    %c0_1 = arith.constant 0 : index
    %c256 = arith.constant 256 : index
    %1 = vector.load %arg5[%c0_1, %c256] : memref<1x640xf32, #tpu.memory_space<vmem>>, vector<1x256xf32>
    %c0_2 = arith.constant 0 : index
    %c512 = arith.constant 512 : index
    %2 = vector.load %arg5[%c0_2, %c512] : memref<1x640xf32, #tpu.memory_space<vmem>>, vector<1x128xf32>
    %c0_3 = arith.constant 0 : index
    %c0_4 = arith.constant 0 : index
    %3 = vector.load %arg1[%c0_3, %c0_4] : memref<8x8xbf16, #tpu.memory_space<vmem>>, vector<8x8xbf16>
    %c0_5 = arith.constant 0 : index
    %c0_6 = arith.constant 0 : index
    %4 = vector.load %arg2[%c0_5, %c0_6] : memref<8x256xbf16, #tpu.memory_space<vmem>>, vector<8x256xbf16>
    %cst = arith.constant dense<0.000000e+00> : vector<8x256xf32>
    %5 = tpu.matmul %3, %4, %cst {dimension_numbers = #tpu.dot_dimension_numbers<[1], [0], [0], [1], [0, 0, 1, 1], [], []>} : vector<8x8xbf16>, vector<8x256xbf16>, vector<8x256xf32> -> vector<8x256xf32>
    %6 = vector.broadcast %0 : vector<1x256xf32> to vector<8x256xf32>
    %7 = arith.addf %5, %6 : vector<8x256xf32>
    %cst_7 = arith.constant 0.000000e+00 : f32
    %8 = vector.broadcast %cst_7 : f32 to vector<8x256xf32>
    %9 = arith.maximumf %7, %8 : vector<8x256xf32>
    %10 = arith.truncf %9 : vector<8x256xf32> to vector<8x256xbf16>
    %c0_8 = arith.constant 0 : index
    %c0_9 = arith.constant 0 : index
    %11 = vector.load %arg3[%c0_8, %c0_9] : memref<256x256xbf16, #tpu.memory_space<vmem>>, vector<256x256xbf16>
    %cst_10 = arith.constant dense<0.000000e+00> : vector<8x256xf32>
    %12 = tpu.matmul %10, %11, %cst_10 {dimension_numbers = #tpu.dot_dimension_numbers<[1], [0], [0], [1], [0, 0, 1, 1], [], []>} : vector<8x256xbf16>, vector<256x256xbf16>, vector<8x256xf32> -> vector<8x256xf32>
    %13 = vector.broadcast %1 : vector<1x256xf32> to vector<8x256xf32>
    %14 = arith.addf %12, %13 : vector<8x256xf32>
    %cst_11 = arith.constant 0.000000e+00 : f32
    %15 = vector.broadcast %cst_11 : f32 to vector<8x256xf32>
    %16 = arith.maximumf %14, %15 : vector<8x256xf32>
    %17 = arith.truncf %16 : vector<8x256xf32> to vector<8x256xbf16>
    %c0_12 = arith.constant 0 : index
    %c0_13 = arith.constant 0 : index
    %18 = vector.load %arg4[%c0_12, %c0_13] : memref<256x128xbf16, #tpu.memory_space<vmem>>, vector<256x128xbf16>
    %cst_14 = arith.constant dense<0.000000e+00> : vector<8x128xf32>
    %19 = tpu.matmul %17, %18, %cst_14 {dimension_numbers = #tpu.dot_dimension_numbers<[1], [0], [0], [1], [0, 0, 1, 1], [], []>} : vector<8x256xbf16>, vector<256x128xbf16>, vector<8x128xf32> -> vector<8x128xf32>
    %20 = vector.broadcast %2 : vector<1x128xf32> to vector<8x128xf32>
    %21 = arith.addf %19, %20 : vector<8x128xf32>
    %c0_15 = arith.constant 0 : index
    %c0_16 = arith.constant 0 : index
    %22 = vector.load %arg6[%c0_15, %c0_16] : memref<8x128xf32, #tpu.memory_space<vmem>>, vector<8x128xf32>
    tpu.vector_store %arg6[%c0_15, %c0_16], %21 {strides = array<i32>} : memref<8x128xf32, #tpu.memory_space<vmem>>, vector<8x128xf32>,
    return
  }
  func.func @transform_0(%arg0: i32) -> (i32, i32) {
    %c0_i32 = arith.constant 0 : i32
    %c0_i32_0 = arith.constant 0 : i32
    return %arg0, %c0_i32 : i32, i32
  }
  func.func @transform_1(%arg0: i32) -> (i32, i32) {
    %c0_i32 = arith.constant 0 : i32
    %c0_i32_0 = arith.constant 0 : i32
    %c0_i32_1 = arith.constant 0 : i32
    return %c0_i32, %c0_i32_0 : i32, i32
  }
  func.func @transform_2(%arg0: i32) -> (i32, i32) {
    %c0_i32 = arith.constant 0 : i32
    %c0_i32_0 = arith.constant 0 : i32
    %c0_i32_1 = arith.constant 0 : i32
    return %c0_i32, %c0_i32_0 : i32, i32
  }
  func.func @transform_3(%arg0: i32) -> (i32, i32) {
    %c0_i32 = arith.constant 0 : i32
    %c0_i32_0 = arith.constant 0 : i32
    %c0_i32_1 = arith.constant 0 : i32
    return %c0_i32, %c0_i32_0 : i32, i32
  }
  func.func @transform_4(%arg0: i32) -> (i32, i32) {
    %c0_i32 = arith.constant 0 : i32
    %c0_i32_0 = arith.constant 0 : i32
    %c0_i32_1 = arith.constant 0 : i32
    return %c0_i32, %c0_i32_0 : i32, i32
  }
  func.func @transform_5(%arg0: i32) -> (i32, i32) {
    %c0_i32 = arith.constant 0 : i32
    %c0_i32_0 = arith.constant 0 : i32
    return %arg0, %c0_i32 : i32, i32
  }
}

</mosaic_0001>

<llo_original>
// kernel: tpu_custom_call.1
$region0: #{tpu_custom_call.1}
  #allocation0 [shape = 'u32[]', space=smem, size = 0x4, offset = 0x4, fixed_abs, tag = 'smem constant byte address 0x4 - core index']
  #allocation1 [shape = 'u32[72,128]{1,0:T(1,128)}', space=vmem, size = 0x9000, scoped, tag = 'internal scratch']
  %s0 = inlined_call_operand.hbm [shape: bf16[8,8], index: 0, kind: input, shape index: {}]
  %s1 = inlined_call_operand.hbm [shape: bf16[8,256], index: 1, kind: input, shape index: {}]
  %s2 = inlined_call_operand.hbm [shape: bf16[256,256], index: 2, kind: input, shape index: {}]
  %s3 = inlined_call_operand.hbm [shape: bf16[256,128], index: 3, kind: input, shape index: {}]
  %s4 = inlined_call_operand.hbm [shape: f32[1,640], index: 4, kind: input, shape index: {}]
  %s5 = inlined_call_operand.hbm [shape: f32[8,128], index: 5, kind: output, shape index: {}]
  %s6 = sld [smem:[#allocation0]]
  $region50: #{tpu_custom_call.1} parent=0
    _
  %s8 = ssub.s32 1, %s6
  %s9 = scalar_select 0, %s8, %s6
  $region1: #{tpu_custom_call.1} parent=0
    #allocation2 [shape = 'u8[2048]{0}', space=vmem, size = 0x800, scoped, tag = 'input window, operand 0, single buffered']
    #allocation3 [shape = 's32[1]{0}', space=sflag, size = 0x4, scoped, tag = 'scoped memory for tpu_custom_call.1']
    #allocation4 [shape = 's32[1]{0}', space=sflag, size = 0x4, scoped, tag = 'scoped memory for tpu_custom_call.1']
    #allocation5 [shape = 'u8[4096]{0}', space=vmem, size = 0x1000, scoped, tag = 'input window, operand 1, single buffered']
    #allocation6 [shape = 's32[1]{0}', space=sflag, size = 0x4, scoped, tag = 'scoped memory for tpu_custom_call.1']
    #allocation7 [shape = 'u8[131072]{0}', space=vmem, size = 0x20000, scoped, tag = 'input window, operand 2, single buffered']
    #allocation8 [shape = 'u8[65536]{0}', space=vmem, size = 0x10000, scoped, tag = 'input window, operand 3, single buffered']
    #allocation9 [shape = 's32[1]{0}', space=sflag, size = 0x4, scoped, tag = 'scoped memory for tpu_custom_call.1']
    #allocation10 [shape = 'u8[2560]{0}', space=vmem, size = 0xc00, scoped, tag = 'input window, operand 4, single buffered']
    #allocation11 [shape = 'u8[4096]{0}', space=vmem, size = 0x1000, scoped, tag = 'output window, operand 0, single buffered']
    %10 = vsyncpa [#allocation3], 0
    %11 = vsyncpa [#allocation6], 0
    %12 = vsyncpa [#allocation9], 0
    %13 = vsyncpa [#allocation4], 0
    // Predicated region
    $region2: #{tpu_custom_call.1} parent=1 // pred_check
      _
    $region3: #{tpu_custom_call.1} parent=1 // pred_check_branch
      %15 = sbr.rel (0) target = $region5
    $region4: #{tpu_custom_call.1} parent=1 // pred_region
      %17 = vsyncadd [#allocation3], 0
      %s19 = sshll.u32 %s0, 4
      %s20 = int_to_ptr.hbm [resolvable:$true] %s19
      %s21 = sshll.u32 [#allocation2], 4
      %s22 = int_to_ptr.vmem [resolvable:$true] %s21
      %24 = dma.hbm_to_vmem [thread:$0]  %s20, 64, %s22, [#allocation3]
    $region5: #{tpu_custom_call.1} parent=1 // pred_fallthru
      _
    // Predicated region
    $region6: #{tpu_custom_call.1} parent=1 // pred_check
      _
    $region7: #{tpu_custom_call.1} parent=1 // pred_check_branch
      %26 = sbr.rel (0) target = $region9
    $region8: #{tpu_custom_call.1} parent=1 // pred_region
      %28 = vsyncadd [#allocation6], 0
      %s30 = sshll.u32 %s1, 4
      %s31 = int_to_ptr.hbm [resolvable:$true] %s30
      %s32 = sshll.u32 [#allocation5], 4
      %s33 = int_to_ptr.vmem [resolvable:$true] %s32
      %35 = dma.hbm_to_vmem [thread:$0]  %s31, 128, %s33, [#allocation6]
    $region9: #{tpu_custom_call.1} parent=1 // pred_fallthru
      _
    // Predicated region
    $region10: #{tpu_custom_call.1} parent=1 // pred_check
      _
    $region11: #{tpu_custom_call.1} parent=1 // pred_check_branch
      %37 = sbr.rel (0) target = $region13
    $region12: #{tpu_custom_call.1} parent=1 // pred_region
      %39 = vsyncadd [#allocation6], 0
      %s40 = sshll.u32 %s2, 4
      %s41 = int_to_ptr.hbm [resolvable:$true] %s40
      %s42 = sshll.u32 [#allocation7], 4
      %s43 = int_to_ptr.vmem [resolvable:$true] %s42
      %48 = dma.hbm_to_vmem [thread:$0]  %s41, 4096, %s43, [#allocation6], 128, 128, 8
    $region13: #{tpu_custom_call.1} parent=1 // pred_fallthru
      _
    // Predicated region
    $region14: #{tpu_custom_call.1} parent=1 // pred_check
      _
    $region15: #{tpu_custom_call.1} parent=1 // pred_check_branch
      %50 = sbr.rel (0) target = $region17
    $region16: #{tpu_custom_call.1} parent=1 // pred_region
      %52 = vsyncadd [#allocation9], 0
      %s53 = sshll.u32 %s3, 4
      %s54 = int_to_ptr.hbm [resolvable:$true] %s53
      %s55 = sshll.u32 [#allocation8], 4
      %s56 = int_to_ptr.vmem [resolvable:$true] %s55
      %61 = dma.hbm_to_vmem [thread:$0]  %s54, 2048, %s56, [#allocation9], 64, 64, 4
    $region17: #{tpu_custom_call.1} parent=1 // pred_fallthru
      _
    // Predicated region
    $region18: #{tpu_custom_call.1} parent=1 // pred_check
      _
    $region19: #{tpu_custom_call.1} parent=1 // pred_check_branch
      %63 = sbr.rel (0) target = $region21
    $region20: #{tpu_custom_call.1} parent=1 // pred_region
      %65 = vsyncadd [#allocation9], 0
      %s67 = sshll.u32 %s4, 4
      %s68 = int_to_ptr.hbm [resolvable:$true] %s67
      %s69 = sshll.u32 [#allocation10], 4
      %s70 = int_to_ptr.vmem [resolvable:$true] %s69
      %72 = dma.hbm_to_vmem [thread:$0]  %s68, 80, %s70, [#allocation9]
    $region21: #{tpu_custom_call.1} parent=1 // pred_fallthru
      _
    // Predicated region
    $region22: #{tpu_custom_call.1} parent=1 // pred_check
      _
    $region23: #{tpu_custom_call.1} parent=1 // pred_check_branch
      %74 = sbr.rel (0) target = $region25
    $region24: #{tpu_custom_call.1} parent=1 // pred_region
      %76 = dma.done [#allocation3], 64
    $region25: #{tpu_custom_call.1} parent=1 // pred_fallthru
      _
    // Predicated region
    $region26: #{tpu_custom_call.1} parent=1 // pred_check
      _
    $region27: #{tpu_custom_call.1} parent=1 // pred_check_branch
      %78 = sbr.rel (0) target = $region29
    $region28: #{tpu_custom_call.1} parent=1 // pred_region
      %80 = dma.done [#allocation6], 128
    $region29: #{tpu_custom_call.1} parent=1 // pred_fallthru
      _
    // Predicated region
    $region30: #{tpu_custom_call.1} parent=1 // pred_check
      _
    $region31: #{tpu_custom_call.1} parent=1 // pred_check_branch
      %82 = sbr.rel (0) target = $region33
    $region32: #{tpu_custom_call.1} parent=1 // pred_region
      %84 = dma.done [#allocation6], 4096
    $region33: #{tpu_custom_call.1} parent=1 // pred_fallthru
      _
    // Predicated region
    $region34: #{tpu_custom_call.1} parent=1 // pred_check
      _
    $region35: #{tpu_custom_call.1} parent=1 // pred_check_branch
      %86 = sbr.rel (0) target = $region37
    $region36: #{tpu_custom_call.1} parent=1 // pred_region
      %88 = dma.done [#allocation9], 2048
    $region37: #{tpu_custom_call.1} parent=1 // pred_fallthru
      _
    // Predicated region
    $region38: #{tpu_custom_call.1} parent=1 // pred_check
      _
    $region39: #{tpu_custom_call.1} parent=1 // pred_check_branch
      %90 = sbr.rel (0) target = $region41
    $region40: #{tpu_custom_call.1} parent=1 // pred_region
      %92 = dma.done [#allocation9], 80
    $region41: #{tpu_custom_call.1} parent=1 // pred_fallthru
      _
    %v94 = vld [vmem:[#allocation10] sm:$0x3]
    %v95 = vld [vmem:[#allocation10 + $0x2] sm:$0x3]
    %v96 = vld [vmem:[#allocation10 + $0x4] sm:$0x1]
    %v97 = vld [vmem:[#allocation2] sm:$0xf]
    %v98 = vld [vmem:[#allocation5] sm:$0xff]
    %v100 = vperm.slane %v94, 0
    %v101 = vperm.slane %v94, 1
    %v105 = vunpack.c.l.b16 %v98
    %v106 = vunpack.c.h.b16 %v98
    %v107 = vpack.c.b16 %v105, %v105
    %v108 = vpack.c.b16 %v106, %v106
    %vm109 = vcmask 64512
    %v111 = vsel %vm109, %v97, 0
    %vm113 = vcmask 1043456
    %v115 = vsel %vm113, %v107, 0
    %v118 = vsel %vm113, %v108, 0
    %120 = vmatpush.bf16.msra.mxu0 0
    %121 = vmatpush.bf16.msra.mxu0 0
    %122 = vmatpush.bf16.msra.mxu0 0
    %123 = vmatpush.bf16.msra.mxu0 0
    %124 = vmatpush.bf16.msra.mxu0 0
    %125 = vmatpush.bf16.msra.mxu0 0
    %126 = vmatpush.bf16.msra.mxu0 0
    %127 = vmatpush.bf16.msra.mxu0 %v115
    %128 = vmatmul.bf16.gmra.mxu0 %v111
    %v129 = vpop.f32.mrf.mxu0
    %v130 = vadd.f32 %v100, %v129
    %v131 = vpop.f32.mrf.mxu0
    %132 = vdwg.mxu0
    %133 = vmatpush.bf16.msra.mxu0 0
    %134 = vmatpush.bf16.msra.mxu0 0
    %135 = vmatpush.bf16.msra.mxu0 0
    %136 = vmatpush.bf16.msra.mxu0 0
    %137 = vmatpush.bf16.msra.mxu0 0
    %138 = vmatpush.bf16.msra.mxu0 0
    %139 = vmatpush.bf16.msra.mxu0 0
    %140 = vmatpush.bf16.msra.mxu0 %v118
    %141 = vmatmul.bf16.gmra.mxu0 %v111
    %v142 = vpop.f32.mrf.mxu0
    %v143 = vadd.f32 %v101, %v142
    %v144 = vpop.f32.mrf.mxu0
    %145 = vdwg.mxu0
    %v146 = vmax.f32 %v130, 0.0
    %v147 = vmax.f32 %v143, 0.0
    %v148 = vpack.c.bf16 %v146, %v146
    %v149 = vpack.c.bf16 %v147, %v147
    %v150 = vld [vmem:[#allocation7] sm:$0xff]
    %v151 = vld [vmem:[#allocation7 + $0x8] sm:$0xff]
    %v152 = vld [vmem:[#allocation7 + $0x10] sm:$0xff]
    %v153 = vld [vmem:[#allocation7 + $0x18] sm:$0xff]
    %v154 = vld [vmem:[#allocation7 + $0x20] sm:$0xff]
    %v155 = vld [vmem:[#allocation7 + $0x28] sm:$0xff]
    %v156 = vld [vmem:[#allocation7 + $0x30] sm:$0xff]
    %v157 = vld [vmem:[#allocation7 + $0x38] sm:$0xff]
    %v158 = vld [vmem:[#allocation7 + $0x40] sm:$0xff]
    %v159 = vld [vmem:[#allocation7 + $0x48] sm:$0xff]
    %v160 = vld [vmem:[#allocation7 + $0x50] sm:$0xff]
    %v161 = vld [vmem:[#allocation7 + $0x58] sm:$0xff]
    %v162 = vld [vmem:[#allocation7 + $0x60] sm:$0xff]
    %v163 = vld [vmem:[#allocation7 + $0x68] sm:$0xff]
    %v164 = vld [vmem:[#allocation7 + $0x70] sm:$0xff]
    %v165 = vld [vmem:[#allocation7 + $0x78] sm:$0xff]
    %v166 = vld [vmem:[#allocation7 + $0x80] sm:$0xff]
    %v167 = vld [vmem:[#allocation7 + $0x88] sm:$0xff]
    %v168 = vld [vmem:[#allocation7 + $0x90] sm:$0xff]
    %v169 = vld [vmem:[#allocation7 + $0x98] sm:$0xff]
    %v170 = vld [vmem:[#allocation7 + $0xa0] sm:$0xff]
    %v171 = vld [vmem:[#allocation7 + $0xa8] sm:$0xff]
    %v172 = vld [vmem:[#allocation7 + $0xb0] sm:$0xff]
    %v173 = vld [vmem:[#allocation7 + $0xb8] sm:$0xff]
    %v174 = vld [vmem:[#allocation7 + $0xc0] sm:$0xff]
    %v175 = vld [vmem:[#allocation7 + $0xc8] sm:$0xff]
    %v176 = vld [vmem:[#allocation7 + $0xd0] sm:$0xff]
    %v177 = vld [vmem:[#allocation7 + $0xd8] sm:$0xff]
    %v178 = vld [vmem:[#allocation7 + $0xe0] sm:$0xff]
    %v179 = vld [vmem:[#allocation7 + $0xe8] sm:$0xff]
    %v180 = vld [vmem:[#allocation7 + $0xf0] sm:$0xff]
    %v181 = vld [vmem:[#allocation7 + $0xf8] sm:$0xff]
    %v183 = vperm.slane %v95, 0
    %v184 = vperm.slane %v95, 1
    %v219 = vunpack.c.l.b16 %v150
    %v220 = vunpack.c.h.b16 %v150
    %v221 = vunpack.c.l.b16 %v151
    %v222 = vunpack.c.h.b16 %v151
    %v223 = vunpack.c.l.b16 %v152
    %v224 = vunpack.c.h.b16 %v152
    %v225 = vunpack.c.l.b16 %v153
    %v226 = vunpack.c.h.b16 %v153
    %v227 = vunpack.c.l.b16 %v154
    %v228 = vunpack.c.h.b16 %v154
    %v229 = vunpack.c.l.b16 %v155
    %v230 = vunpack.c.h.b16 %v155
    %v231 = vunpack.c.l.b16 %v156
    %v232 = vunpack.c.h.b16 %v156
    %v233 = vunpack.c.l.b16 %v157
    %v234 = vunpack.c.h.b16 %v157
    %v235 = vunpack.c.l.b16 %v158
    %v236 = vunpack.c.h.b16 %v158
    %v237 = vunpack.c.l.b16 %v159
    %v238 = vunpack.c.h.b16 %v159
    %v239 = vunpack.c.l.b16 %v160
    %v240 = vunpack.c.h.b16 %v160
    %v241 = vunpack.c.l.b16 %v161
    %v242 = vunpack.c.h.b16 %v161
    %v243 = vunpack.c.l.b16 %v162
    %v244 = vunpack.c.h.b16 %v162
    %v245 = vunpack.c.l.b16 %v163
    %v246 = vunpack.c.h.b16 %v163
    %v247 = vunpack.c.l.b16 %v164
    %v248 = vunpack.c.h.b16 %v164
    %v249 = vunpack.c.l.b16 %v165
    %v250 = vunpack.c.h.b16 %v165
    %v251 = vunpack.c.l.b16 %v166
    %v252 = vunpack.c.h.b16 %v166
    %v253 = vunpack.c.l.b16 %v167
    %v254 = vunpack.c.h.b16 %v167
    %v255 = vunpack.c.l.b16 %v168
    %v256 = vunpack.c.h.b16 %v168
    %v257 = vunpack.c.l.b16 %v169
    %v258 = vunpack.c.h.b16 %v169
    %v259 = vunpack.c.l.b16 %v170
    %v260 = vunpack.c.h.b16 %v170
    %v261 = vunpack.c.l.b16 %v171
    %v262 = vunpack.c.h.b16 %v171
    %v263 = vunpack.c.l.b16 %v172
    %v264 = vunpack.c.h.b16 %v172
    %v265 = vunpack.c.l.b16 %v173
    %v266 = vunpack.c.h.b16 %v173
    %v267 = vunpack.c.l.b16 %v174
    %v268 = vunpack.c.h.b16 %v174
    %v269 = vunpack.c.l.b16 %v175
    %v270 = vunpack.c.h.b16 %v175
    %v271 = vunpack.c.l.b16 %v176
    %v272 = vunpack.c.h.b16 %v176
    %v273 = vunpack.c.l.b16 %v177
    %v274 = vunpack.c.h.b16 %v177
    %v275 = vunpack.c.l.b16 %v178
    %v276 = vunpack.c.h.b16 %v178
    %v277 = vunpack.c.l.b16 %v179
    %v278 = vunpack.c.h.b16 %v179
    %v279 = vunpack.c.l.b16 %v180
    %v280 = vunpack.c.h.b16 %v180
    %v281 = vunpack.c.l.b16 %v181
    %v282 = vunpack.c.h.b16 %v181
    %v283 = vpack.c.b16 %v221, %v219
    %v284 = vpack.c.b16 %v222, %v220
    %v285 = vpack.c.b16 %v225, %v223
    %v286 = vpack.c.b16 %v226, %v224
    %v287 = vpack.c.b16 %v229, %v227
    %v288 = vpack.c.b16 %v230, %v228
    %v289 = vpack.c.b16 %v233, %v231
    %v290 = vpack.c.b16 %v234, %v232
    %v291 = vpack.c.b16 %v237, %v235
    %v292 = vpack.c.b16 %v238, %v236
    %v293 = vpack.c.b16 %v241, %v239
    %v294 = vpack.c.b16 %v242, %v240
    %v295 = vpack.c.b16 %v245, %v243
    %v296 = vpack.c.b16 %v246, %v244
    %v297 = vpack.c.b16 %v249, %v247
    %v298 = vpack.c.b16 %v250, %v248
    %v299 = vpack.c.b16 %v253, %v251
    %v300 = vpack.c.b16 %v254, %v252
    %v301 = vpack.c.b16 %v257, %v255
    %v302 = vpack.c.b16 %v258, %v256
    %v303 = vpack.c.b16 %v261, %v259
    %v304 = vpack.c.b16 %v262, %v260
    %v305 = vpack.c.b16 %v265, %v263
    %v306 = vpack.c.b16 %v266, %v264
    %v307 = vpack.c.b16 %v269, %v267
    %v308 = vpack.c.b16 %v270, %v268
    %v309 = vpack.c.b16 %v273, %v271
    %v310 = vpack.c.b16 %v274, %v272
    %v311 = vpack.c.b16 %v277, %v275
    %v312 = vpack.c.b16 %v278, %v276
    %v313 = vpack.c.b16 %v281, %v279
    %v314 = vpack.c.b16 %v282, %v280
    %347 = vmatpush.bf16.msra.mxu0 %v297
    %348 = vmatpush.bf16.msra.mxu0 %v295
    %349 = vmatpush.bf16.msra.mxu0 %v293
    %350 = vmatpush.bf16.msra.mxu0 %v291
    %351 = vmatpush.bf16.msra.mxu0 %v289
    %352 = vmatpush.bf16.msra.mxu0 %v287
    %353 = vmatpush.bf16.msra.mxu0 %v285
    %354 = vmatpush.bf16.msra.mxu0 %v283
    %355 = vmatmul.bf16.gmra.mxu0 %v148
    %v356 = vpop.f32.mrf.mxu0
    %v357 = vadd.f32 %v183, %v356
    %v358 = vpop.f32.mrf.mxu0
    %359 = vdwg.mxu0
    %360 = vmatpush.bf16.msra.mxu0 %v313
    %361 = vmatpush.bf16.msra.mxu0 %v311
    %362 = vmatpush.bf16.msra.mxu0 %v309
    %363 = vmatpush.bf16.msra.mxu0 %v307
    %364 = vmatpush.bf16.msra.mxu0 %v305
    %365 = vmatpush.bf16.msra.mxu0 %v303
    %366 = vmatpush.bf16.msra.mxu0 %v301
    %367 = vmatpush.bf16.msra.mxu0 %v299
    %368 = vmatmul.bf16.gmra.mxu0 %v149
    %v369 = vpop.f32.mrf.mxu0
    %v370 = vadd.f32 %v357, %v369
    %v371 = vpop.f32.mrf.mxu0
    %372 = vdwg.mxu0
    %373 = vmatpush.bf16.msra.mxu0 %v298
    %374 = vmatpush.bf16.msra.mxu0 %v296
    %375 = vmatpush.bf16.msra.mxu0 %v294
    %376 = vmatpush.bf16.msra.mxu0 %v292
    %377 = vmatpush.bf16.msra.mxu0 %v290
    %378 = vmatpush.bf16.msra.mxu0 %v288
    %379 = vmatpush.bf16.msra.mxu0 %v286
    %380 = vmatpush.bf16.msra.mxu0 %v284
    %381 = vmatmul.bf16.gmra.mxu0 %v148
    %v382 = vpop.f32.mrf.mxu0
    %v383 = vadd.f32 %v184, %v382
    %v384 = vpop.f32.mrf.mxu0
    %385 = vdwg.mxu0
    %386 = vmatpush.bf16.msra.mxu0 %v314
    %387 = vmatpush.bf16.msra.mxu0 %v312
    %388 = vmatpush.bf16.msra.mxu0 %v310
    %389 = vmatpush.bf16.msra.mxu0 %v308
    %390 = vmatpush.bf16.msra.mxu0 %v306
    %391 = vmatpush.bf16.msra.mxu0 %v304
    %392 = vmatpush.bf16.msra.mxu0 %v302
    %393 = vmatpush.bf16.msra.mxu0 %v300
    %394 = vmatmul.bf16.gmra.mxu0 %v149
    %v395 = vpop.f32.mrf.mxu0
    %v396 = vadd.f32 %v383, %v395
    %v397 = vpop.f32.mrf.mxu0
    %398 = vdwg.mxu0
    %v399 = vmax.f32 %v370, 0.0
    %v400 = vmax.f32 %v396, 0.0
    %v401 = vpack.c.bf16 %v399, %v399
    %v402 = vpack.c.bf16 %v400, %v400
    %v403 = vld [vmem:[#allocation8] sm:$0xf]
    %v404 = vld [vmem:[#allocation8 + $0x4] sm:$0xf]
    %v405 = vld [vmem:[#allocation8 + $0x8] sm:$0xf]
    %v406 = vld [vmem:[#allocation8 + $0xc] sm:$0xf]
    %v407 = vld [vmem:[#allocation8 + $0x10] sm:$0xf]
    %v408 = vld [vmem:[#allocation8 + $0x14] sm:$0xf]
    %v409 = vld [vmem:[#allocation8 + $0x18] sm:$0xf]
    %v410 = vld [vmem:[#allocation8 + $0x1c] sm:$0xf]
    %v411 = vld [vmem:[#allocation8 + $0x20] sm:$0xf]
    %v412 = vld [vmem:[#allocation8 + $0x24] sm:$0xf]
    %v413 = vld [vmem:[#allocation8 + $0x28] sm:$0xf]
    %v414 = vld [vmem:[#allocation8 + $0x2c] sm:$0xf]
    %v415 = vld [vmem:[#allocation8 + $0x30] sm:$0xf]
    %v416 = vld [vmem:[#allocation8 + $0x34] sm:$0xf]
    %v417 = vld [vmem:[#allocation8 + $0x38] sm:$0xf]
    %v418 = vld [vmem:[#allocation8 + $0x3c] sm:$0xf]
    %v419 = vld [vmem:[#allocation8 + $0x40] sm:$0xf]
    %v420 = vld [vmem:[#allocation8 + $0x44] sm:$0xf]
    %v421 = vld [vmem:[#allocation8 + $0x48] sm:$0xf]
    %v422 = vld [vmem:[#allocation8 + $0x4c] sm:$0xf]
    %v423 = vld [vmem:[#allocation8 + $0x50] sm:$0xf]
    %v424 = vld [vmem:[#allocation8 + $0x54] sm:$0xf]
    %v425 = vld [vmem:[#allocation8 + $0x58] sm:$0xf]
    %v426 = vld [vmem:[#allocation8 + $0x5c] sm:$0xf]
    %v427 = vld [vmem:[#allocation8 + $0x60] sm:$0xf]
    %v428 = vld [vmem:[#allocation8 + $0x64] sm:$0xf]
    %v429 = vld [vmem:[#allocation8 + $0x68] sm:$0xf]
    %v430 = vld [vmem:[#allocation8 + $0x6c] sm:$0xf]
    %v431 = vld [vmem:[#allocation8 + $0x70] sm:$0xf]
    %v432 = vld [vmem:[#allocation8 + $0x74] sm:$0xf]
    %v433 = vld [vmem:[#allocation8 + $0x78] sm:$0xf]
    %v434 = vld [vmem:[#allocation8 + $0x7c] sm:$0xf]
    %v436 = vperm.slane %v96, 0
    %v470 = vunpack.c.l.b16 %v403
    %v471 = vunpack.c.l.b16 %v404
    %v472 = vunpack.c.l.b16 %v405
    %v473 = vunpack.c.l.b16 %v406
    %v474 = vunpack.c.l.b16 %v407
    %v475 = vunpack.c.l.b16 %v408
    %v476 = vunpack.c.l.b16 %v409
    %v477 = vunpack.c.l.b16 %v410
    %v478 = vunpack.c.l.b16 %v411
    %v479 = vunpack.c.l.b16 %v412
    %v480 = vunpack.c.l.b16 %v413
    %v481 = vunpack.c.l.b16 %v414
    %v482 = vunpack.c.l.b16 %v415
    %v483 = vunpack.c.l.b16 %v416
    %v484 = vunpack.c.l.b16 %v417
    %v485 = vunpack.c.l.b16 %v418
    %v486 = vunpack.c.l.b16 %v419
    %v487 = vunpack.c.l.b16 %v420
    %v488 = vunpack.c.l.b16 %v421
    %v489 = vunpack.c.l.b16 %v422
    %v490 = vunpack.c.l.b16 %v423
    %v491 = vunpack.c.l.b16 %v424
    %v492 = vunpack.c.l.b16 %v425
    %v493 = vunpack.c.l.b16 %v426
    %v494 = vunpack.c.l.b16 %v427
    %v495 = vunpack.c.l.b16 %v428
    %v496 = vunpack.c.l.b16 %v429
    %v497 = vunpack.c.l.b16 %v430
    %v498 = vunpack.c.l.b16 %v431
    %v499 = vunpack.c.l.b16 %v432
    %v500 = vunpack.c.l.b16 %v433
    %v501 = vunpack.c.l.b16 %v434
    %v502 = vpack.c.b16 %v471, %v470
    %v503 = vpack.c.b16 %v473, %v472
    %v504 = vpack.c.b16 %v475, %v474
    %v505 = vpack.c.b16 %v477, %v476
    %v506 = vpack.c.b16 %v479, %v478
    %v507 = vpack.c.b16 %v481, %v480
    %v508 = vpack.c.b16 %v483, %v482
    %v509 = vpack.c.b16 %v485, %v484
    %v510 = vpack.c.b16 %v487, %v486
    %v511 = vpack.c.b16 %v489, %v488
    %v512 = vpack.c.b16 %v491, %v490
    %v513 = vpack.c.b16 %v493, %v492
    %v514 = vpack.c.b16 %v495, %v494
    %v515 = vpack.c.b16 %v497, %v496
    %v516 = vpack.c.b16 %v499, %v498
    %v517 = vpack.c.b16 %v501, %v500
    %534 = vmatpush.bf16.msra.mxu0 %v509
    %535 = vmatpush.bf16.msra.mxu0 %v508
    %536 = vmatpush.bf16.msra.mxu0 %v507
    %537 = vmatpush.bf16.msra.mxu0 %v506
    %538 = vmatpush.bf16.msra.mxu0 %v505
    %539 = vmatpush.bf16.msra.mxu0 %v504
    %540 = vmatpush.bf16.msra.mxu0 %v503
    %541 = vmatpush.bf16.msra.mxu0 %v502
    %542 = vmatmul.bf16.gmra.mxu0 %v401
    %v543 = vpop.f32.mrf.mxu0
    %v544 = vadd.f32 %v436, %v543
    %v545 = vpop.f32.mrf.mxu0
    %546 = vdwg.mxu0
    %547 = vmatpush.bf16.msra.mxu0 %v517
    %548 = vmatpush.bf16.msra.mxu0 %v516
    %549 = vmatpush.bf16.msra.mxu0 %v515
    %550 = vmatpush.bf16.msra.mxu0 %v514
    %551 = vmatpush.bf16.msra.mxu0 %v513
    %552 = vmatpush.bf16.msra.mxu0 %v512
    %553 = vmatpush.bf16.msra.mxu0 %v511
    %554 = vmatpush.bf16.msra.mxu0 %v510
    %555 = vmatmul.bf16.gmra.mxu0 %v402
    %v556 = vpop.f32.mrf.mxu0
    %v557 = vadd.f32 %v544, %v556
    %v558 = vpop.f32.mrf.mxu0
    %559 = vdwg.mxu0
    %560 = vst [vmem:[#allocation11] sm:$0xff] %v557
    // Predicated region
    $region42: #{tpu_custom_call.1} parent=1 // pred_check
      _
    $region43: #{tpu_custom_call.1} parent=1 // pred_check_branch
      %562 = sbr.rel (0) target = $region45
    $region44: #{tpu_custom_call.1} parent=1 // pred_region
      %564 = vsyncadd [#allocation4], 0
      %s566 = sshll.u32 [#allocation11], 4
      %s567 = int_to_ptr.vmem [resolvable:$true] %s566
      %s568 = sshll.u32 %s5, 4
      %s569 = int_to_ptr.hbm [resolvable:$true] %s568
      %571 = dma.vmem_to_hbm [thread:$0]  %s567, 128, %s569, [#allocation4]
    $region45: #{tpu_custom_call.1} parent=1 // pred_fallthru
      _
    // Predicated region
    $region46: #{tpu_custom_call.1} parent=1 // pred_check
      _
    $region47: #{tpu_custom_call.1} parent=1 // pred_check_branch
      %573 = sbr.rel (0) target = $region49
    $region48: #{tpu_custom_call.1} parent=1 // pred_region
      %575 = dma.done [#allocation4], 128
    $region49: #{tpu_custom_call.1} parent=1 // pred_fallthru
      _
    %576 = vsyncpa [#allocation3], 1
    %577 = vsyncpa [#allocation6], 1
    %578 = vsyncpa [#allocation9], 1
    %579 = vsyncpa [#allocation4], 1

</llo_original>
